<compile_context>
chip_gen: v7x
topology: tpu7x:2x2x1
jax: 0.10.0
libtpu: 0.0.40
codegen_flags: <defaults>
</compile_context>

<pallas_src>
import jax
import jax.numpy as jnp
from jax.experimental import pallas as pl
from jax.experimental.pallas import tpu as pltpu

BN_EPS = 1e-5
H = 128  # lane-dense padded width for hidden (64) and output feature dims


def decoder_kernel(x_ref, w_ref, v_ref, o_ref):
    lp = x_ref.shape[1]  # padded latent dim (multiple of 16)

    # Static slices of the packed parameter buffers (zero-cost ref views).
    w1 = w_ref[0:lp, :]                # bf16 [lp, 128]
    w2 = w_ref[lp:lp + H, :]           # bf16 [128, 128]
    w3 = w_ref[lp + H:lp + 2 * H, :]   # bf16 [128, 128]
    b1 = v_ref[0:1, :]                 # f32  [1, 128]
    b3 = v_ref[1:2, :]
    gamma = v_ref[2:3, :]
    beta = v_ref[3:4, :]

    # dec_1 + ReLU  (x already bf16; f32 accumulation, f32 elementwise)
    h1 = jnp.dot(x_ref[...], w1, preferred_element_type=jnp.float32) + b1
    h1 = jnp.maximum(h1, 0.0)

    # dec_2 — the Linear bias b2 cancels exactly under training-mode BN
    # (mean subtraction removes it, variance is unchanged), so it is omitted.
    h2 = jnp.dot(h1.astype(jnp.bfloat16), w2, preferred_element_type=jnp.float32)

    # BatchNorm1d (training-mode batch stats), one pass over h2, folded into
    # a single scale/shift.
    mean = jnp.mean(h2, axis=0, keepdims=True)
    var = jnp.maximum(jnp.mean(h2 * h2, axis=0, keepdims=True) - mean * mean, 0.0)
    s = gamma * jax.lax.rsqrt(var + BN_EPS)   # rsqrt -> EUP (free slot)
    t = beta - mean * s
    h3 = jnp.maximum(h2 * s + t, 0.0)

    # dec_3 — lane-dense [B, 128] store.
    o_ref[...] = jnp.dot(h3.astype(jnp.bfloat16), w3,
                         preferred_element_type=jnp.float32) + b3


def _round_up(n, m):
    return ((n + m - 1) // m) * m


def init_params(key, latent_space, output_size):
    """Deterministic synthetic params.  Linear weights stored as [in, out]."""
    ks = jax.random.split(key, 6)

    def lin(kw, kb, fan_in, fan_out):
        bound = 1.0 / jnp.sqrt(fan_in)
        w = jax.random.uniform(kw, (fan_in, fan_out), jnp.float32, -bound, bound)
        b = jax.random.uniform(kb, (1, fan_out), jnp.float32, -bound, bound)
        return w, b

    w1, b1 = lin(ks[0], ks[1], latent_space, 64)
    w2, b2 = lin(ks[2], ks[3], 64, 64)
    w3, b3 = lin(ks[4], ks[5], 64, output_size)
    gamma = jnp.ones((1, 64), jnp.float32)   # BatchNorm1d weight
    beta = jnp.zeros((1, 64), jnp.float32)   # BatchNorm1d bias
    return (w1, b1, w2, b2, w3, b3, gamma, beta)


def pack_params(params):
    """Zero-pad feature dims to 128 and pack into (bf16 weight slab, f32 vectors).

    b2 is intentionally NOT packed: it cancels under training-mode BatchNorm.
    gamma/beta MUST be zero-padded so the padded lanes stay exactly zero
    (s = 0, t = 0); otherwise rsqrt(var=0 + eps) would leak into pad lanes.
    """
    w1, b1, w2, b2, w3, b3, gamma, beta = params
    del b2  # mathematically dead under training-mode BN
    assert gamma.shape == (1, 64) and beta.shape == (1, 64)
    latent = w1.shape[0]
    lp = _round_up(latent, 16)  # bf16 sublane tile = 16 rows -> aligned slices

    def pad2(a, rows, cols=H):
        return jnp.pad(a, ((0, rows - a.shape[0]), (0, cols - a.shape[1])))

    wbuf = jnp.concatenate(
        [pad2(w1, lp), pad2(w2, H), pad2(w3, H)], axis=0).astype(jnp.bfloat16)
    vbuf = jnp.concatenate(
        [pad2(b1, 1), pad2(b3, 1), pad2(gamma, 1), pad2(beta, 1),
         jnp.zeros((4, H), jnp.float32)], axis=0)  # -> [8, 128] f32
    # Padding-safety check (pack_params is not jitted, so this is a host check).
    assert bool(jnp.all(vbuf[2:4, 64:] == 0.0)), "gamma/beta must be zero-padded"
    return wbuf, vbuf, lp


def decoder_forward(x, wbuf, vbuf, lp, output_size):
    """x: [B, latent_space] float32.  Returns [B, output_size] float32."""
    B, latent = x.shape
    if latent != lp:
        x = jnp.pad(x, ((0, 0), (0, lp - latent)))
    # Cast to bf16 host-side: halves the x DMA, removes an in-kernel cast.
    x = x.astype(jnp.bfloat16)

    flops = 2 * B * (lp * H + H * H + H * H)
    bytes_accessed = x.size * 2 + wbuf.size * 2 + vbuf.size * 4 + B * H * 4
    vmem = pl.BlockSpec(memory_space=pltpu.MemorySpace.VMEM)

    out = pl.pallas_call(
        decoder_kernel,
        out_shape=jax.ShapeDtypeStruct((B, H), jnp.float32),
        in_specs=[vmem, vmem, vmem],
        out_specs=vmem,
        cost_estimate=pl.CostEstimate(
            flops=flops, transcendentals=H, bytes_accessed=bytes_accessed),
    )(x, wbuf, vbuf)
    # Slice the lane-dense [B,128] slab back to the logical output width.
    return out[:, :output_size]


def decoder_ref(x, params):
    """Pure-JAX reference (keeps b2!) with the same bf16-at-dot-boundary numerics."""
    w1, b1, w2, b2, w3, b3, gamma, beta = params

    def mm(a, w):
        return jnp.dot(a.astype(jnp.bfloat16), w.astype(jnp.bfloat16),
                       preferred_element_type=jnp.float32)

    h1 = jax.nn.relu(mm(x, w1) + b1)
    h2 = mm(h1, w2) + b2
    mean = jnp.mean(h2, axis=0, keepdims=True)
    var = jnp.mean((h2 - mean) ** 2, axis=0, keepdims=True)
    h3 = jax.nn.relu((h2 - mean) * jax.lax.rsqrt(var + BN_EPS) * gamma + beta)
    return mm(h3, w3) + b3


if __name__ == "__main__":
    key = jax.random.PRNGKey(0)
    k_x, k_p = jax.random.split(key)

    B = 8
    latent_space = 16
    output_size = 32

    x = jax.random.normal(k_x, (B, latent_space), jnp.float32)
    params = init_params(k_p, latent_space, output_size)
    wbuf, vbuf, lp = pack_params(params)

    out = decoder_forward(x, wbuf, vbuf, lp, output_size)
    out = jax.block_until_ready(out)

    ref = decoder_ref(x, params)
    assert out.shape == (B, output_size)
    max_err = jnp.max(jnp.abs(out - ref))
    assert jnp.allclose(out, ref, atol=1e-3, rtol=1e-3), f"max abs err {max_err}"

    print("KERNEL_OK")
</pallas_src>

<mosaic_0001>
module attributes {stable_mosaic.version = 11 : i64} {
  func.func @decoder_kernel(%arg0: memref<8x16xbf16, #tpu.memory_space<vmem>>, %arg1: memref<272x128xbf16, #tpu.memory_space<vmem>>, %arg2: memref<8x128xf32, #tpu.memory_space<vmem>>, %arg3: memref<8x128xf32, #tpu.memory_space<vmem>>) attributes {dimension_semantics = [], scalar_prefetch = 0 : i64, scratch_operands = 0 : i64, tpu.core_type = #tpu.core_type<tc>} {
    %c0 = arith.constant 0 : index
    %c0_0 = arith.constant 0 : index
    %0 = vector.load %arg1[%c0, %c0_0] : memref<272x128xbf16, #tpu.memory_space<vmem>>, vector<16x128xbf16>
    %c16 = arith.constant 16 : index
    %c0_1 = arith.constant 0 : index
    %1 = vector.load %arg1[%c16, %c0_1] : memref<272x128xbf16, #tpu.memory_space<vmem>>, vector<128x128xbf16>
    %c144 = arith.constant 144 : index
    %c0_2 = arith.constant 0 : index
    %2 = vector.load %arg1[%c144, %c0_2] : memref<272x128xbf16, #tpu.memory_space<vmem>>, vector<128x128xbf16>
    %c0_3 = arith.constant 0 : index
    %c0_4 = arith.constant 0 : index
    %3 = vector.load %arg2[%c0_3, %c0_4] : memref<8x128xf32, #tpu.memory_space<vmem>>, vector<1x128xf32>
    %c1 = arith.constant 1 : index
    %c0_5 = arith.constant 0 : index
    %4 = vector.load %arg2[%c1, %c0_5] : memref<8x128xf32, #tpu.memory_space<vmem>>, vector<1x128xf32>
    %c2 = arith.constant 2 : index
    %c0_6 = arith.constant 0 : index
    %5 = vector.load %arg2[%c2, %c0_6] : memref<8x128xf32, #tpu.memory_space<vmem>>, vector<1x128xf32>
    %c3 = arith.constant 3 : index
    %c0_7 = arith.constant 0 : index
    %6 = vector.load %arg2[%c3, %c0_7] : memref<8x128xf32, #tpu.memory_space<vmem>>, vector<1x128xf32>
    %c0_8 = arith.constant 0 : index
    %c0_9 = arith.constant 0 : index
    %7 = vector.load %arg0[%c0_8, %c0_9] : memref<8x16xbf16, #tpu.memory_space<vmem>>, vector<8x16xbf16>
    %cst = arith.constant dense<0.000000e+00> : vector<8x128xf32>
    %8 = tpu.matmul %7, %0, %cst {dimension_numbers = #tpu.dot_dimension_numbers<[1], [0], [0], [1], [0, 0, 1, 1], [], []>} : vector<8x16xbf16>, vector<16x128xbf16>, vector<8x128xf32> -> vector<8x128xf32>
    %9 = vector.broadcast %3 : vector<1x128xf32> to vector<8x128xf32>
    %10 = arith.addf %8, %9 : vector<8x128xf32>
    %cst_10 = arith.constant 0.000000e+00 : f32
    %11 = vector.broadcast %cst_10 : f32 to vector<8x128xf32>
    %12 = arith.maximumf %10, %11 : vector<8x128xf32>
    %13 = arith.truncf %12 : vector<8x128xf32> to vector<8x128xbf16>
    %cst_11 = arith.constant dense<0.000000e+00> : vector<8x128xf32>
    %14 = tpu.matmul %13, %1, %cst_11 {dimension_numbers = #tpu.dot_dimension_numbers<[1], [0], [0], [1], [0, 0, 1, 1], [], []>} : vector<8x128xbf16>, vector<128x128xbf16>, vector<8x128xf32> -> vector<8x128xf32>
    %cst_12 = arith.constant dense<0.000000e+00> : vector<128xf32>
    %15 = vector.multi_reduction <add>, %14, %cst_12 [0] : vector<8x128xf32> to vector<128xf32>
    %16 = vector.shape_cast %15 : vector<128xf32> to vector<1x128xf32>
    %cst_13 = arith.constant 8.000000e+00 : f32
    %17 = vector.broadcast %cst_13 : f32 to vector<1x128xf32>
    %18 = arith.divf %16, %17 : vector<1x128xf32>
    %19 = arith.mulf %14, %14 : vector<8x128xf32>
    %cst_14 = arith.constant dense<0.000000e+00> : vector<128xf32>
    %20 = vector.multi_reduction <add>, %19, %cst_14 [0] : vector<8x128xf32> to vector<128xf32>
    %21 = vector.shape_cast %20 : vector<128xf32> to vector<1x128xf32>
    %cst_15 = arith.constant 8.000000e+00 : f32
    %22 = vector.broadcast %cst_15 : f32 to vector<1x128xf32>
    %23 = arith.divf %21, %22 : vector<1x128xf32>
    %24 = arith.mulf %18, %18 : vector<1x128xf32>
    %25 = arith.subf %23, %24 : vector<1x128xf32>
    %cst_16 = arith.constant 0.000000e+00 : f32
    %26 = vector.broadcast %cst_16 : f32 to vector<1x128xf32>
    %27 = arith.maximumf %25, %26 : vector<1x128xf32>
    %cst_17 = arith.constant 9.99999974E-6 : f32
    %28 = vector.broadcast %cst_17 : f32 to vector<1x128xf32>
    %29 = arith.addf %27, %28 : vector<1x128xf32>
    %30 = math.rsqrt %29 : vector<1x128xf32>
    %31 = arith.mulf %5, %30 : vector<1x128xf32>
    %32 = arith.mulf %18, %31 : vector<1x128xf32>
    %33 = arith.subf %6, %32 : vector<1x128xf32>
    %34 = vector.broadcast %31 : vector<1x128xf32> to vector<8x128xf32>
    %35 = arith.mulf %14, %34 : vector<8x128xf32>
    %36 = vector.broadcast %33 : vector<1x128xf32> to vector<8x128xf32>
    %37 = arith.addf %35, %36 : vector<8x128xf32>
    %cst_18 = arith.constant 0.000000e+00 : f32
    %38 = vector.broadcast %cst_18 : f32 to vector<8x128xf32>
    %39 = arith.maximumf %37, %38 : vector<8x128xf32>
    %40 = arith.truncf %39 : vector<8x128xf32> to vector<8x128xbf16>
    %cst_19 = arith.constant dense<0.000000e+00> : vector<8x128xf32>
    %41 = tpu.matmul %40, %2, %cst_19 {dimension_numbers = #tpu.dot_dimension_numbers<[1], [0], [0], [1], [0, 0, 1, 1], [], []>} : vector<8x128xbf16>, vector<128x128xbf16>, vector<8x128xf32> -> vector<8x128xf32>
    %42 = vector.broadcast %4 : vector<1x128xf32> to vector<8x128xf32>
    %43 = arith.addf %41, %42 : vector<8x128xf32>
    %c0_20 = arith.constant 0 : index
    %c0_21 = arith.constant 0 : index
    %44 = vector.load %arg3[%c0_20, %c0_21] : memref<8x128xf32, #tpu.memory_space<vmem>>, vector<8x128xf32>
    tpu.vector_store %arg3[%c0_20, %c0_21], %43 {strides = array<i32>} : memref<8x128xf32, #tpu.memory_space<vmem>>, vector<8x128xf32>,
    return
  }
}

</mosaic_0001>

<llo_original>
// kernel: tpu_custom_call.1
$region0: #{tpu_custom_call.1}
  #allocation0 [shape = 'u32[]', space=smem, size = 0x4, offset = 0x4, fixed_abs, tag = 'smem constant byte address 0x4 - core index']
  #allocation1 [shape = 'u32[144,128]{1,0:T(1,128)}', space=vmem, size = 0x12000, scoped, tag = 'internal scratch']
  %s0 = inlined_call_operand.hbm [shape: bf16[8,16], index: 0, kind: input, shape index: {}]
  %s1 = inlined_call_operand.hbm [shape: bf16[272,128], index: 1, kind: input, shape index: {}]
  %s2 = inlined_call_operand.hbm [shape: f32[8,128], index: 2, kind: input, shape index: {}]
  %s3 = inlined_call_operand.hbm [shape: f32[8,128], index: 3, kind: output, shape index: {}]
  %s4 = sld [smem:[#allocation0]]
  $region34: #{tpu_custom_call.1} parent=0
    _
  %s6 = ssub.s32 1, %s4
  %s7 = scalar_select 0, %s6, %s4
  $region1: #{tpu_custom_call.1} parent=0
    #allocation2 [shape = 'u8[2048]{0}', space=vmem, size = 0x800, scoped, tag = 'input window, operand 0, single buffered']
    #allocation3 [shape = 's32[1]{0}', space=sflag, size = 0x4, scoped, tag = 'scoped memory for tpu_custom_call.1']
    #allocation4 [shape = 's32[1]{0}', space=sflag, size = 0x4, scoped, tag = 'scoped memory for tpu_custom_call.1']
    #allocation5 [shape = 'u8[69632]{0}', space=vmem, size = 0x11000, scoped, tag = 'input window, operand 1, single buffered']
    #allocation6 [shape = 's32[1]{0}', space=sflag, size = 0x4, scoped, tag = 'scoped memory for tpu_custom_call.1']
    #allocation7 [shape = 'u8[4096]{0}', space=vmem, size = 0x1000, scoped, tag = 'input window, operand 2, single buffered']
    #allocation8 [shape = 'u8[4096]{0}', space=vmem, size = 0x1000, scoped, tag = 'output window, operand 0, single buffered']
    %8 = vsyncpa [#allocation3], 0
    %9 = vsyncpa [#allocation6], 0
    %10 = vsyncpa [#allocation4], 0
    // Predicated region
    $region2: #{tpu_custom_call.1} parent=1 // pred_check
      _
    $region3: #{tpu_custom_call.1} parent=1 // pred_check_branch
      %12 = sbr.rel (0) target = $region5
    $region4: #{tpu_custom_call.1} parent=1 // pred_region
      %s14 = ssub.s32 64, 64
      %15 = vsyncadd [#allocation3], %s14
      %s17 = sshll.u32 [#allocation2], 4
      %s18 = int_to_ptr.vmem [resolvable:$true] %s17
      %20 = dma.hbm_to_vmem [thread:$0]  %s0, 64, %s18, [#allocation3]
    $region5: #{tpu_custom_call.1} parent=1 // pred_fallthru
      _
    // Predicated region
    $region6: #{tpu_custom_call.1} parent=1 // pred_check
      _
    $region7: #{tpu_custom_call.1} parent=1 // pred_check_branch
      %22 = sbr.rel (0) target = $region9
    $region8: #{tpu_custom_call.1} parent=1 // pred_region
      %s24 = ssub.s32 2176, 2176
      %25 = vsyncadd [#allocation6], %s24
      %s26 = sshll.u32 [#allocation5], 4
      %s27 = int_to_ptr.vmem [resolvable:$true] %s26
      %32 = dma.hbm_to_vmem [thread:$0]  %s1, 2176, %s27, [#allocation6], 64, 64, 4
    $region9: #{tpu_custom_call.1} parent=1 // pred_fallthru
      _
    // Predicated region
    $region10: #{tpu_custom_call.1} parent=1 // pred_check
      _
    $region11: #{tpu_custom_call.1} parent=1 // pred_check_branch
      %34 = sbr.rel (0) target = $region13
    $region12: #{tpu_custom_call.1} parent=1 // pred_region
      %s36 = ssub.s32 128, 128
      %37 = vsyncadd [#allocation6], %s36
      %s39 = sshll.u32 [#allocation7], 4
      %s40 = int_to_ptr.vmem [resolvable:$true] %s39
      %42 = dma.hbm_to_vmem [thread:$0]  %s2, 128, %s40, [#allocation6]
    $region13: #{tpu_custom_call.1} parent=1 // pred_fallthru
      _
    // Predicated region
    $region14: #{tpu_custom_call.1} parent=1 // pred_check
      _
    $region15: #{tpu_custom_call.1} parent=1 // pred_check_branch
      %44 = sbr.rel (0) target = $region17
    $region16: #{tpu_custom_call.1} parent=1 // pred_region
      %45 = dma.done [#allocation3], 64
    $region17: #{tpu_custom_call.1} parent=1 // pred_fallthru
      _
    // Predicated region
    $region18: #{tpu_custom_call.1} parent=1 // pred_check
      _
    $region19: #{tpu_custom_call.1} parent=1 // pred_check_branch
      %47 = sbr.rel (0) target = $region21
    $region20: #{tpu_custom_call.1} parent=1 // pred_region
      %48 = dma.done [#allocation6], 2176
    $region21: #{tpu_custom_call.1} parent=1 // pred_fallthru
      _
    // Predicated region
    $region22: #{tpu_custom_call.1} parent=1 // pred_check
      _
    $region23: #{tpu_custom_call.1} parent=1 // pred_check_branch
      %50 = sbr.rel (0) target = $region25
    $region24: #{tpu_custom_call.1} parent=1 // pred_region
      %51 = dma.done [#allocation6], 128
    $region25: #{tpu_custom_call.1} parent=1 // pred_fallthru
      _
    %v53 = vld [vmem:[#allocation5] sm:$0xf]
    %v54 = vld [vmem:[#allocation5 + $0x4] sm:$0xf]
    %v55 = vld [vmem:[#allocation5 + $0x8] sm:$0xf]
    %v56 = vld [vmem:[#allocation5 + $0xc] sm:$0xf]
    %v57 = vld [vmem:[#allocation5 + $0x10] sm:$0xf]
    %v58 = vld [vmem:[#allocation5 + $0x14] sm:$0xf]
    %v59 = vld [vmem:[#allocation5 + $0x18] sm:$0xf]
    %v60 = vld [vmem:[#allocation5 + $0x1c] sm:$0xf]
    %v61 = vld [vmem:[#allocation5 + $0x20] sm:$0xf]
    %v62 = vld [vmem:[#allocation5 + $0x24] sm:$0xf]
    %v63 = vld [vmem:[#allocation5 + $0x28] sm:$0xf]
    %v64 = vld [vmem:[#allocation5 + $0x2c] sm:$0xf]
    %v65 = vld [vmem:[#allocation5 + $0x30] sm:$0xf]
    %v66 = vld [vmem:[#allocation5 + $0x34] sm:$0xf]
    %v67 = vld [vmem:[#allocation5 + $0x38] sm:$0xf]
    %v68 = vld [vmem:[#allocation5 + $0x3c] sm:$0xf]
    %v69 = vld [vmem:[#allocation5 + $0x40] sm:$0xf]
    %v70 = vld [vmem:[#allocation5 + $0x44] sm:$0xf]
    %v71 = vld [vmem:[#allocation5 + $0x48] sm:$0xf]
    %v72 = vld [vmem:[#allocation5 + $0x4c] sm:$0xf]
    %v73 = vld [vmem:[#allocation5 + $0x50] sm:$0xf]
    %v74 = vld [vmem:[#allocation5 + $0x54] sm:$0xf]
    %v75 = vld [vmem:[#allocation5 + $0x58] sm:$0xf]
    %v76 = vld [vmem:[#allocation5 + $0x5c] sm:$0xf]
    %v77 = vld [vmem:[#allocation5 + $0x60] sm:$0xf]
    %v78 = vld [vmem:[#allocation5 + $0x64] sm:$0xf]
    %v79 = vld [vmem:[#allocation5 + $0x68] sm:$0xf]
    %v80 = vld [vmem:[#allocation5 + $0x6c] sm:$0xf]
    %v81 = vld [vmem:[#allocation5 + $0x70] sm:$0xf]
    %v82 = vld [vmem:[#allocation5 + $0x74] sm:$0xf]
    %v83 = vld [vmem:[#allocation5 + $0x78] sm:$0xf]
    %v84 = vld [vmem:[#allocation5 + $0x7c] sm:$0xf]
    %v85 = vld [vmem:[#allocation5 + $0x80] sm:$0xf]
    %v86 = vld [vmem:[#allocation5 + $0x84] sm:$0xf]
    %v87 = vld [vmem:[#allocation7] sm:$0x1]
    %v88 = vld [vmem:[#allocation7 + $0x1] sm:$0x1]
    %v89 = vld [vmem:[#allocation7 + $0x2] sm:$0x1]
    %v90 = vld [vmem:[#allocation7 + $0x3] sm:$0x1]
    %v91 = vld [vmem:[#allocation2] sm:$0xf]
    %v92 = vlaneseq
    %v93 = vshrl.u32 %v92, 7
    %v94 = vsub.s32 0, %v93
    %v95 = vrot.slane %v87, %v94
    %v98 = vunpack.c.l.b16 %v53
    %v99 = vunpack.c.l.b16 %v54
    %v100 = vpack.c.b16 %v99, %v98
    %vm102 = vcmask 130048
    %v104 = vsel %vm102, %v91, 0
    %106 = vmatprep.subr.bf16.mxu0 0
    %107 = vmatpush1.bf16.msra.mxu0 %v100
    %108 = vmatprep.subr.bf16.mxu0 0
    %109 = vmatpush1.bf16.msra.mxu0 0
    %110 = vmatprep.subr.bf16.mxu0 0
    %111 = vmatpush1.bf16.msra.mxu0 0
    %112 = vmatprep.subr.bf16.mxu0 0
    %113 = vmatpush1.bf16.msra.mxu0 0
    %114 = vmatprep.subr.bf16.mxu0 0
    %115 = vmatpush1.bf16.msra.mxu0 0
    %116 = vmatprep.subr.bf16.mxu0 0
    %117 = vmatpush1.bf16.msra.mxu0 0
    %118 = vmatprep.subr.bf16.mxu0 0
    %119 = vmatpush1.bf16.msra.mxu0 0
    %120 = vmatprep.subr.bf16.mxu0 0
    %121 = vmatpush1.bf16.msra.mxu0 0
    %122 = vmatprep.subr.bf16.mxu0 0
    %123 = vmatpush1.bf16.msra.mxu0 0
    %124 = vmatprep.subr.bf16.mxu0 0
    %125 = vmatpush1.bf16.msra.mxu0 0
    %126 = vmatprep.subr.bf16.mxu0 0
    %127 = vmatpush1.bf16.msra.mxu0 0
    %128 = vmatprep.subr.bf16.mxu0 0
    %129 = vmatpush1.bf16.msra.mxu0 0
    %130 = vmatprep.subr.bf16.mxu0 0
    %131 = vmatpush1.bf16.msra.mxu0 0
    %132 = vmatprep.subr.bf16.mxu0 0
    %133 = vmatpush1.bf16.msra.mxu0 0
    %134 = vmatprep.subr.bf16.mxu0 0
    %135 = vmatpush1.bf16.msra.mxu0 0
    %136 = vmatprep.subr.bf16.mxu0 0
    %137 = vmatpush1.bf16.msra.mxu0 0
    %138 = vmatprep.mubr.bf16.mxu0 0
    %139 = vmatmul.mubr.bf16.gmra.mrb[0].mxu0 %v104
    %v140 = vpop.f32.mrb[0].mxu0
    %v141 = vadd.f32 %v95, %v140
    %v142 = vpop.f32.mrb[0].mxu0
    %v143 = vpop.f32.mrb[0].mxu0
    %v144 = vpop.f32.mrb[0].mxu0
    %145 = vdwg.mxu0
    %v146 = vmax.f32 %v141, 0.0
    %v147 = vpack.c.bf16 %v146, %v146
    %v164 = vunpack.c.l.b16 %v55
    %v165 = vunpack.c.l.b16 %v56
    %v166 = vunpack.c.l.b16 %v57
    %v167 = vunpack.c.l.b16 %v58
    %v168 = vunpack.c.l.b16 %v59
    %v169 = vunpack.c.l.b16 %v60
    %v170 = vunpack.c.l.b16 %v61
    %v171 = vunpack.c.l.b16 %v62
    %v172 = vunpack.c.l.b16 %v63
    %v173 = vunpack.c.l.b16 %v64
    %v174 = vunpack.c.l.b16 %v65
    %v175 = vunpack.c.l.b16 %v66
    %v176 = vunpack.c.l.b16 %v67
    %v177 = vunpack.c.l.b16 %v68
    %v178 = vunpack.c.l.b16 %v69
    %v179 = vunpack.c.l.b16 %v70
    %v180 = vpack.c.b16 %v165, %v164
    %v181 = vpack.c.b16 %v167, %v166
    %v182 = vpack.c.b16 %v169, %v168
    %v183 = vpack.c.b16 %v171, %v170
    %v184 = vpack.c.b16 %v173, %v172
    %v185 = vpack.c.b16 %v175, %v174
    %v186 = vpack.c.b16 %v177, %v176
    %v187 = vpack.c.b16 %v179, %v178
    %196 = vmatprep.subr.bf16.mxu0 0
    %197 = vmatpush1.bf16.msra.mxu0 %v180
    %198 = vmatprep.subr.bf16.mxu0 0
    %199 = vmatpush1.bf16.msra.mxu0 %v181
    %200 = vmatprep.subr.bf16.mxu0 0
    %201 = vmatpush1.bf16.msra.mxu0 %v182
    %202 = vmatprep.subr.bf16.mxu0 0
    %203 = vmatpush1.bf16.msra.mxu0 %v183
    %204 = vmatprep.subr.bf16.mxu0 0
    %205 = vmatpush1.bf16.msra.mxu0 %v184
    %206 = vmatprep.subr.bf16.mxu0 0
    %207 = vmatpush1.bf16.msra.mxu0 %v185
    %208 = vmatprep.subr.bf16.mxu0 0
    %209 = vmatpush1.bf16.msra.mxu0 %v186
    %210 = vmatprep.subr.bf16.mxu0 0
    %211 = vmatpush1.bf16.msra.mxu0 %v187
    %212 = vmatprep.subr.bf16.mxu0 0
    %213 = vmatpush1.bf16.msra.mxu0 0
    %214 = vmatprep.subr.bf16.mxu0 0
    %215 = vmatpush1.bf16.msra.mxu0 0
    %216 = vmatprep.subr.bf16.mxu0 0
    %217 = vmatpush1.bf16.msra.mxu0 0
    %218 = vmatprep.subr.bf16.mxu0 0
    %219 = vmatpush1.bf16.msra.mxu0 0
    %220 = vmatprep.subr.bf16.mxu0 0
    %221 = vmatpush1.bf16.msra.mxu0 0
    %222 = vmatprep.subr.bf16.mxu0 0
    %223 = vmatpush1.bf16.msra.mxu0 0
    %224 = vmatprep.subr.bf16.mxu0 0
    %225 = vmatpush1.bf16.msra.mxu0 0
    %226 = vmatprep.subr.bf16.mxu0 0
    %227 = vmatpush1.bf16.msra.mxu0 0
    %228 = vmatprep.mubr.bf16.mxu0 0
    %229 = vmatmul.mubr.bf16.gmra.mrb[0].mxu0 %v147
    %v230 = vpop.f32.mrb[0].mxu0
    %v231 = vadd.f32 0.0, %v230
    %v232 = vpop.f32.mrb[0].mxu0
    %v233 = vpop.f32.mrb[0].mxu0
    %v234 = vpop.f32.mrb[0].mxu0
    %235 = vdwg.mxu0
    %v236 = vrot.slane %v231, 4
    %v237 = vadd.f32 %v231, %v236
    %v238 = vrot.slane %v237, 2
    %v239 = vadd.f32 %v237, %v238
    %v240 = vrot.slane %v239, 1
    %v241 = vadd.f32 %v239, %v240
    %v242 = vrcp.pop 8.0
    %v243 = vmul.f32 %v241, %v242
    %v244 = vmul.f32 %v231, %v231
    %v245 = vrot.slane %v244, 4
    %v246 = vadd.f32 %v244, %v245
    %v247 = vrot.slane %v246, 2
    %v248 = vadd.f32 %v246, %v247
    %v249 = vrot.slane %v248, 1
    %v250 = vadd.f32 %v248, %v249
    %v251 = vmul.f32 %v250, %v242
    %v252 = vmul.f32 %v243, %v243
    %v253 = vsub.f32 %v251, %v252
    %v254 = vmax.f32 %v253, 0.0
    %v255 = vadd.f32 %v254, 1e-05
    %v256 = vrsqrt.pop %v255
    %v257 = vmul.f32 %v89, %v256
    %v258 = vmul.f32 %v243, %v257
    %v259 = vsub.f32 %v90, %v258
    %v260 = vlaneseq
    %v261 = vshrl.u32 %v260, 7
    %v262 = vsub.s32 0, %v261
    %v263 = vrot.slane %v257, %v262
    %v264 = vmul.f32 %v231, %v263
    %v265 = vlaneseq
    %v266 = vshrl.u32 %v265, 7
    %v267 = vsub.s32 0, %v266
    %v268 = vrot.slane %v259, %v267
    %v269 = vadd.f32 %v264, %v268
    %v270 = vmax.f32 %v269, 0.0
    %v271 = vpack.c.bf16 %v270, %v270
    %v272 = vlaneseq
    %v273 = vshrl.u32 %v272, 7
    %v274 = vsub.s32 0, %v273
    %v275 = vrot.slane %v88, %v274
    %v292 = vunpack.c.l.b16 %v71
    %v293 = vunpack.c.l.b16 %v72
    %v294 = vunpack.c.l.b16 %v73
    %v295 = vunpack.c.l.b16 %v74
    %v296 = vunpack.c.l.b16 %v75
    %v297 = vunpack.c.l.b16 %v76
    %v298 = vunpack.c.l.b16 %v77
    %v299 = vunpack.c.l.b16 %v78
    %v300 = vunpack.c.l.b16 %v79
    %v301 = vunpack.c.l.b16 %v80
    %v302 = vunpack.c.l.b16 %v81
    %v303 = vunpack.c.l.b16 %v82
    %v304 = vunpack.c.l.b16 %v83
    %v305 = vunpack.c.l.b16 %v84
    %v306 = vunpack.c.l.b16 %v85
    %v307 = vunpack.c.l.b16 %v86
    %v308 = vpack.c.b16 %v293, %v292
    %v309 = vpack.c.b16 %v295, %v294
    %v310 = vpack.c.b16 %v297, %v296
    %v311 = vpack.c.b16 %v299, %v298
    %v312 = vpack.c.b16 %v301, %v300
    %v313 = vpack.c.b16 %v303, %v302
    %v314 = vpack.c.b16 %v305, %v304
    %v315 = vpack.c.b16 %v307, %v306
    %324 = vmatprep.subr.bf16.mxu0 0
    %325 = vmatpush1.bf16.msra.mxu0 %v308
    %326 = vmatprep.subr.bf16.mxu0 0
    %327 = vmatpush1.bf16.msra.mxu0 %v309
    %328 = vmatprep.subr.bf16.mxu0 0
    %329 = vmatpush1.bf16.msra.mxu0 %v310
    %330 = vmatprep.subr.bf16.mxu0 0
    %331 = vmatpush1.bf16.msra.mxu0 %v311
    %332 = vmatprep.subr.bf16.mxu0 0
    %333 = vmatpush1.bf16.msra.mxu0 %v312
    %334 = vmatprep.subr.bf16.mxu0 0
    %335 = vmatpush1.bf16.msra.mxu0 %v313
    %336 = vmatprep.subr.bf16.mxu0 0
    %337 = vmatpush1.bf16.msra.mxu0 %v314
    %338 = vmatprep.subr.bf16.mxu0 0
    %339 = vmatpush1.bf16.msra.mxu0 %v315
    %340 = vmatprep.subr.bf16.mxu0 0
    %341 = vmatpush1.bf16.msra.mxu0 0
    %342 = vmatprep.subr.bf16.mxu0 0
    %343 = vmatpush1.bf16.msra.mxu0 0
    %344 = vmatprep.subr.bf16.mxu0 0
    %345 = vmatpush1.bf16.msra.mxu0 0
    %346 = vmatprep.subr.bf16.mxu0 0
    %347 = vmatpush1.bf16.msra.mxu0 0
    %348 = vmatprep.subr.bf16.mxu0 0
    %349 = vmatpush1.bf16.msra.mxu0 0
    %350 = vmatprep.subr.bf16.mxu0 0
    %351 = vmatpush1.bf16.msra.mxu0 0
    %352 = vmatprep.subr.bf16.mxu0 0
    %353 = vmatpush1.bf16.msra.mxu0 0
    %354 = vmatprep.subr.bf16.mxu0 0
    %355 = vmatpush1.bf16.msra.mxu0 0
    %356 = vmatprep.mubr.bf16.mxu0 0
    %357 = vmatmul.mubr.bf16.gmra.mrb[0].mxu0 %v271
    %v358 = vpop.f32.mrb[0].mxu0
    %v359 = vadd.f32 %v275, %v358
    %v360 = vpop.f32.mrb[0].mxu0
    %v361 = vpop.f32.mrb[0].mxu0
    %v362 = vpop.f32.mrb[0].mxu0
    %363 = vdwg.mxu0
    %364 = vst [vmem:[#allocation8] sm:$0xff] %v359
    // Predicated region
    $region26: #{tpu_custom_call.1} parent=1 // pred_check
      _
    $region27: #{tpu_custom_call.1} parent=1 // pred_check_branch
      %366 = sbr.rel (0) target = $region29
    $region28: #{tpu_custom_call.1} parent=1 // pred_region
      %s368 = ssub.s32 128, 128
      %369 = vsyncadd [#allocation4], %s368
      %s371 = sshll.u32 [#allocation8], 4
      %s372 = int_to_ptr.vmem [resolvable:$true] %s371
      %374 = dma.vmem_to_hbm [thread:$0]  %s372, 128, %s3, [#allocation4]
    $region29: #{tpu_custom_call.1} parent=1 // pred_fallthru
      _
    // Predicated region
    $region30: #{tpu_custom_call.1} parent=1 // pred_check
      _
    $region31: #{tpu_custom_call.1} parent=1 // pred_check_branch
      %376 = sbr.rel (0) target = $region33
    $region32: #{tpu_custom_call.1} parent=1 // pred_region
      %377 = dma.done [#allocation4], 128
    $region33: #{tpu_custom_call.1} parent=1 // pred_fallthru
      _
    %378 = vsyncpa [#allocation3], 1
    %379 = vsyncpa [#allocation6], 1
    %380 = vsyncpa [#allocation4], 1

</llo_original>
